<compile_context>
chip_gen: v6e
topology: v6e:2x2x1
jax: 0.10.0
libtpu: 0.0.40
codegen_flags: <defaults>
</compile_context>

<pallas_src>
import functools

import jax
import jax.numpy as jnp
from jax.experimental import pallas as pl
from jax.experimental.pallas import tpu as pltpu


# ----------------------------------------------------------------------------
# Pallas kernel: full LSTM recurrence + output projection + log_softmax.
# All operands are tiny and live fully in VMEM (no grid / tiling).
# ----------------------------------------------------------------------------
def _lstm_kernel(x_ref, wx_ref, wh_ref, b_ref, wp_ref, bp_ref, y_ref,
                 *, seq_len, batch):
    # x_ref : (T*Bp, E)    embedded inputs, flattened over time, batch-padded
    # wx_ref: (E, 4H)      fused input->gate weights [g|i|f|o], transposed
    # wh_ref: (H, 4H)      fused hidden->gate weights [g|i|f|o], transposed
    # b_ref : (1, 4H)      fused gate biases
    # wp_ref: (H, Cp)      output projection, transposed, class-dim zero-padded
    # bp_ref: (1, Cp)      output bias, padded class lanes hold -inf
    # y_ref : (Bp, Cp)     log-softmax output (lane-dense full-vreg store)
    H = wh_ref.shape[0]
    B = batch

    # Hoisted input path: one matmul for all timesteps, bias folded in once.
    xw = (jnp.dot(x_ref[...], wx_ref[...], preferred_element_type=jnp.float32)
          + b_ref[...])                                        # (T*Bp, 4H)

    wh = wh_ref[...]                                           # hoisted load

    h = jnp.zeros((B, H), jnp.float32)
    c = jnp.zeros((B, H), jnp.float32)

    # T is small and static -> fully unrolled recurrence; per-step work is a
    # single 128-lane-wide matmul plus full-vreg tanh/sigmoid.
    for t in range(seq_len):
        a = xw[t * B:(t + 1) * B, :] + jnp.dot(
            h, wh, preferred_element_type=jnp.float32)         # (Bp, 4H)
        ta = jnp.tanh(a)
        sa = jax.nn.sigmoid(a)
        g = ta[:, 0 * H:1 * H]
        i = sa[:, 1 * H:2 * H]
        f = sa[:, 2 * H:3 * H]
        o = sa[:, 3 * H:4 * H]
        c = g * i + c * f
        h = jnp.tanh(c) * o

    # Projection + log_softmax on a lane-dense (Bp, 128) tile. Padded class
    # lanes are -inf (from bp) so they contribute 0 to the lse.
    p = jnp.dot(h, wp_ref[...], preferred_element_type=jnp.float32) + bp_ref[...]
    m = jnp.max(p, axis=-1, keepdims=True)
    lse = jnp.log(jnp.sum(jnp.exp(p - m), axis=-1, keepdims=True)) + m
    y_ref[...] = p - lse


# ----------------------------------------------------------------------------
# One-time weight preprocessing: fuse/transpose/pad. Constant for a fixed model,
# so it is kept out of the per-call forward path.
# ----------------------------------------------------------------------------
def prepare_weights(params):
    f32 = jnp.float32
    Wx = jnp.concatenate([params["W_gx"].T, params["W_ix"].T,
                          params["W_fx"].T, params["W_ox"].T], axis=1)  # (E, 4H)
    Wh = jnp.concatenate([params["W_gh"].T, params["W_ih"].T,
                          params["W_fh"].T, params["W_oh"].T], axis=1)  # (H, 4H)
    b = jnp.concatenate([params["b_g"].T, params["b_i"].T,
                         params["b_f"].T, params["b_o"].T], axis=1)     # (1, 4H)
    Wp = params["W_ph"].T                                               # (H, C)
    bp = params["b_p"].T                                                # (1, C)
    C = Wp.shape[1]
    C_pad = max(128, ((C + 127) // 128) * 128)
    Wp_pad = jnp.pad(Wp, ((0, 0), (0, C_pad - C)))
    bp_pad = jnp.concatenate(
        [bp, jnp.full((1, C_pad - C), -jnp.inf, f32)], axis=1)
    return {
        "embedding": params["embedding"].astype(f32),
        "Wx": Wx.astype(f32), "Wh": Wh.astype(f32), "b": b.astype(f32),
        "Wp": Wp_pad.astype(f32), "bp": bp_pad.astype(f32),
    }


# ----------------------------------------------------------------------------
# Wrapper (glue): embedding gather, batch padding, pallas_call, un-padding.
# ----------------------------------------------------------------------------
@jax.jit
def lstm_forward(x_tokens, prep):
    B, T = x_tokens.shape
    C = prep["embedding"].shape[0]            # num_classes
    E = prep["embedding"].shape[1]
    H = prep["Wh"].shape[0]
    C_pad = prep["Wp"].shape[1]
    B_pad = max(8, ((B + 7) // 8) * 8)        # sublane-multiple batch

    # Embedding lookup is a data-dependent row gather -> plain JAX glue.
    emb = prep["embedding"][x_tokens]                           # (B, T, E)
    x = jnp.transpose(emb, (1, 0, 2)).astype(jnp.float32)       # (T, B, E)
    x = jnp.pad(x, ((0, 0), (0, B_pad - B), (0, 0)))            # (T, Bp, E)
    x_flat = x.reshape(T * B_pad, E)                            # (T*Bp, E)

    kernel = functools.partial(_lstm_kernel, seq_len=T, batch=B_pad)
    vmem = pl.BlockSpec(memory_space=pltpu.MemorySpace.VMEM)
    y_pad = pl.pallas_call(
        kernel,
        out_shape=jax.ShapeDtypeStruct((B_pad, C_pad), jnp.float32),
        in_specs=[vmem] * 6,
        out_specs=vmem,
    )(x_flat, prep["Wx"], prep["Wh"], prep["b"], prep["Wp"], prep["bp"])
    return y_pad[:B, :C]                                        # (B, C)


# ----------------------------------------------------------------------------
# Deterministic parameter init (mirrors the module's __init__ shapes).
# kaiming_normal_: std = gain / sqrt(fan_in); gain('linear')=1, gain('tanh')=5/3.
# Biases are zeros. Embedding ~ N(0, 1).
# ----------------------------------------------------------------------------
def init_params(key, hidden_dim, num_classes):
    embed_dim = hidden_dim // 2
    ks = jax.random.split(key, 10)
    lin_std = 1.0 / (embed_dim ** 0.5)
    tanh_std = (5.0 / 3.0) / (hidden_dim ** 0.5)
    f32 = jnp.float32
    params = {
        "embedding": jax.random.normal(ks[0], (num_classes, embed_dim), f32),
        "W_gx": lin_std * jax.random.normal(ks[1], (hidden_dim, embed_dim), f32),
        "W_ix": lin_std * jax.random.normal(ks[2], (hidden_dim, embed_dim), f32),
        "W_fx": lin_std * jax.random.normal(ks[3], (hidden_dim, embed_dim), f32),
        "W_ox": lin_std * jax.random.normal(ks[4], (hidden_dim, embed_dim), f32),
        "W_gh": tanh_std * jax.random.normal(ks[5], (hidden_dim, hidden_dim), f32),
        "W_ih": tanh_std * jax.random.normal(ks[6], (hidden_dim, hidden_dim), f32),
        "W_fh": tanh_std * jax.random.normal(ks[7], (hidden_dim, hidden_dim), f32),
        "W_oh": tanh_std * jax.random.normal(ks[8], (hidden_dim, hidden_dim), f32),
        "b_g": jnp.zeros((hidden_dim, 1), f32),
        "b_i": jnp.zeros((hidden_dim, 1), f32),
        "b_f": jnp.zeros((hidden_dim, 1), f32),
        "b_o": jnp.zeros((hidden_dim, 1), f32),
        "W_ph": tanh_std * jax.random.normal(ks[9], (num_classes, hidden_dim), f32),
        "b_p": jnp.zeros((num_classes, 1), f32),
    }
    return params


# ----------------------------------------------------------------------------
# Pure-JAX reference mirroring the PyTorch forward exactly (for validation).
# ----------------------------------------------------------------------------
def lstm_forward_ref(x_tokens, params, hidden_dim):
    B, T = x_tokens.shape
    h = jnp.zeros((hidden_dim, B), jnp.float32)
    c = jnp.zeros((hidden_dim, B), jnp.float32)
    for t in range(T):
        x_t = params["embedding"][x_tokens[:, t]].T             # (E, B)
        g = jnp.tanh(params["W_gx"] @ x_t + params["W_gh"] @ h + params["b_g"])
        i = jax.nn.sigmoid(params["W_ix"] @ x_t + params["W_ih"] @ h + params["b_i"])
        f = jax.nn.sigmoid(params["W_fx"] @ x_t + params["W_fh"] @ h + params["b_f"])
        o = jax.nn.sigmoid(params["W_ox"] @ x_t + params["W_oh"] @ h + params["b_o"])
        c = g * i + c * f
        h = jnp.tanh(c) * o
    p = params["W_ph"] @ h + params["b_p"]                       # (C, B)
    y = jax.nn.log_softmax(p, axis=0)
    return y.T                                                   # (B, C)


if __name__ == "__main__":
    seq_length = 8
    hidden_dim = 32
    num_classes = 10
    batch_size = 2

    key = jax.random.PRNGKey(0)
    k_params, k_x = jax.random.split(key)
    params = init_params(k_params, hidden_dim, num_classes)
    prep = prepare_weights(params)          # one-time weight fusion/padding

    # x: integer token sequences, shape (batch, seq_length)
    x = jax.random.randint(k_x, (batch_size, seq_length), 0, num_classes,
                           dtype=jnp.int32)

    y = lstm_forward(x, prep)
    y = jax.block_until_ready(y)

    y_ref = lstm_forward_ref(x, params, hidden_dim)
    assert y.shape == (batch_size, num_classes)
    assert jnp.allclose(y, y_ref, atol=1e-4, rtol=1e-4), "mismatch vs reference"

    print("KERNEL_OK")
</pallas_src>

<mosaic_0001>
module attributes {stable_mosaic.version = 11 : i64} {
  func.func @_lstm_kernel(%arg0: memref<64x16xf32, #tpu.memory_space<vmem>>, %arg1: memref<16x128xf32, #tpu.memory_space<vmem>>, %arg2: memref<32x128xf32, #tpu.memory_space<vmem>>, %arg3: memref<1x128xf32, #tpu.memory_space<vmem>>, %arg4: memref<32x128xf32, #tpu.memory_space<vmem>>, %arg5: memref<1x128xf32, #tpu.memory_space<vmem>>, %arg6: memref<8x128xf32, #tpu.memory_space<vmem>>) attributes {dimension_semantics = [], scalar_prefetch = 0 : i64, scratch_operands = 0 : i64, tpu.core_type = #tpu.core_type<tc>} {
    %c0 = arith.constant 0 : index
    %c0_0 = arith.constant 0 : index
    %0 = vector.load %arg0[%c0, %c0_0] : memref<64x16xf32, #tpu.memory_space<vmem>>, vector<64x16xf32>
    %c0_1 = arith.constant 0 : index
    %c0_2 = arith.constant 0 : index
    %1 = vector.load %arg1[%c0_1, %c0_2] : memref<16x128xf32, #tpu.memory_space<vmem>>, vector<16x128xf32>
    %cst = arith.constant dense<0.000000e+00> : vector<64x128xf32>
    %2 = tpu.matmul %0, %1, %cst {dimension_numbers = #tpu.dot_dimension_numbers<[1], [0], [0], [1], [0, 0, 1, 1], [], []>} : vector<64x16xf32>, vector<16x128xf32>, vector<64x128xf32> -> vector<64x128xf32>
    %c0_3 = arith.constant 0 : index
    %c0_4 = arith.constant 0 : index
    %3 = vector.load %arg3[%c0_3, %c0_4] : memref<1x128xf32, #tpu.memory_space<vmem>>, vector<1x128xf32>
    %4 = vector.broadcast %3 : vector<1x128xf32> to vector<64x128xf32>
    %5 = arith.addf %2, %4 : vector<64x128xf32>
    %c0_5 = arith.constant 0 : index
    %c0_6 = arith.constant 0 : index
    %6 = vector.load %arg2[%c0_5, %c0_6] : memref<32x128xf32, #tpu.memory_space<vmem>>, vector<32x128xf32>
    %cst_7 = arith.constant 0.000000e+00 : f32
    %7 = vector.broadcast %cst_7 : f32 to vector<8x32xf32>
    %cst_8 = arith.constant 0.000000e+00 : f32
    %8 = vector.broadcast %cst_8 : f32 to vector<8x32xf32>
    %9 = vector.extract_strided_slice %5 {offsets = [0, 0], sizes = [8, 128], strides = [1, 1]} : vector<64x128xf32> to vector<8x128xf32>
    %cst_9 = arith.constant dense<0.000000e+00> : vector<8x128xf32>
    %10 = tpu.matmul %7, %6, %cst_9 {dimension_numbers = #tpu.dot_dimension_numbers<[1], [0], [0], [1], [0, 0, 1, 1], [], []>} : vector<8x32xf32>, vector<32x128xf32>, vector<8x128xf32> -> vector<8x128xf32>
    %11 = arith.addf %9, %10 : vector<8x128xf32>
    %12 = math.tanh %11 : vector<8x128xf32>
    %13 = arith.negf %11 : vector<8x128xf32>
    %14 = math.exp %13 : vector<8x128xf32>
    %cst_10 = arith.constant 1.000000e+00 : f32
    %15 = vector.broadcast %cst_10 : f32 to vector<8x128xf32>
    %16 = arith.addf %15, %14 : vector<8x128xf32>
    %17 = arith.divf %15, %16 : vector<8x128xf32>
    %18 = vector.extract_strided_slice %12 {offsets = [0, 0], sizes = [8, 32], strides = [1, 1]} : vector<8x128xf32> to vector<8x32xf32>
    %19 = vector.extract_strided_slice %17 {offsets = [0, 32], sizes = [8, 32], strides = [1, 1]} : vector<8x128xf32> to vector<8x32xf32>
    %20 = vector.extract_strided_slice %17 {offsets = [0, 64], sizes = [8, 32], strides = [1, 1]} : vector<8x128xf32> to vector<8x32xf32>
    %21 = vector.extract_strided_slice %17 {offsets = [0, 96], sizes = [8, 32], strides = [1, 1]} : vector<8x128xf32> to vector<8x32xf32>
    %22 = arith.mulf %18, %19 : vector<8x32xf32>
    %23 = arith.mulf %8, %20 : vector<8x32xf32>
    %24 = arith.addf %22, %23 : vector<8x32xf32>
    %25 = math.tanh %24 : vector<8x32xf32>
    %26 = arith.mulf %25, %21 : vector<8x32xf32>
    %27 = vector.extract_strided_slice %5 {offsets = [8, 0], sizes = [8, 128], strides = [1, 1]} : vector<64x128xf32> to vector<8x128xf32>
    %cst_11 = arith.constant dense<0.000000e+00> : vector<8x128xf32>
    %28 = tpu.matmul %26, %6, %cst_11 {dimension_numbers = #tpu.dot_dimension_numbers<[1], [0], [0], [1], [0, 0, 1, 1], [], []>} : vector<8x32xf32>, vector<32x128xf32>, vector<8x128xf32> -> vector<8x128xf32>
    %29 = arith.addf %27, %28 : vector<8x128xf32>
    %30 = math.tanh %29 : vector<8x128xf32>
    %31 = arith.negf %29 : vector<8x128xf32>
    %32 = math.exp %31 : vector<8x128xf32>
    %cst_12 = arith.constant 1.000000e+00 : f32
    %33 = vector.broadcast %cst_12 : f32 to vector<8x128xf32>
    %34 = arith.addf %33, %32 : vector<8x128xf32>
    %35 = arith.divf %33, %34 : vector<8x128xf32>
    %36 = vector.extract_strided_slice %30 {offsets = [0, 0], sizes = [8, 32], strides = [1, 1]} : vector<8x128xf32> to vector<8x32xf32>
    %37 = vector.extract_strided_slice %35 {offsets = [0, 32], sizes = [8, 32], strides = [1, 1]} : vector<8x128xf32> to vector<8x32xf32>
    %38 = vector.extract_strided_slice %35 {offsets = [0, 64], sizes = [8, 32], strides = [1, 1]} : vector<8x128xf32> to vector<8x32xf32>
    %39 = vector.extract_strided_slice %35 {offsets = [0, 96], sizes = [8, 32], strides = [1, 1]} : vector<8x128xf32> to vector<8x32xf32>
    %40 = arith.mulf %36, %37 : vector<8x32xf32>
    %41 = arith.mulf %24, %38 : vector<8x32xf32>
    %42 = arith.addf %40, %41 : vector<8x32xf32>
    %43 = math.tanh %42 : vector<8x32xf32>
    %44 = arith.mulf %43, %39 : vector<8x32xf32>
    %45 = vector.extract_strided_slice %5 {offsets = [16, 0], sizes = [8, 128], strides = [1, 1]} : vector<64x128xf32> to vector<8x128xf32>
    %cst_13 = arith.constant dense<0.000000e+00> : vector<8x128xf32>
    %46 = tpu.matmul %44, %6, %cst_13 {dimension_numbers = #tpu.dot_dimension_numbers<[1], [0], [0], [1], [0, 0, 1, 1], [], []>} : vector<8x32xf32>, vector<32x128xf32>, vector<8x128xf32> -> vector<8x128xf32>
    %47 = arith.addf %45, %46 : vector<8x128xf32>
    %48 = math.tanh %47 : vector<8x128xf32>
    %49 = arith.negf %47 : vector<8x128xf32>
    %50 = math.exp %49 : vector<8x128xf32>
    %cst_14 = arith.constant 1.000000e+00 : f32
    %51 = vector.broadcast %cst_14 : f32 to vector<8x128xf32>
    %52 = arith.addf %51, %50 : vector<8x128xf32>
    %53 = arith.divf %51, %52 : vector<8x128xf32>
    %54 = vector.extract_strided_slice %48 {offsets = [0, 0], sizes = [8, 32], strides = [1, 1]} : vector<8x128xf32> to vector<8x32xf32>
    %55 = vector.extract_strided_slice %53 {offsets = [0, 32], sizes = [8, 32], strides = [1, 1]} : vector<8x128xf32> to vector<8x32xf32>
    %56 = vector.extract_strided_slice %53 {offsets = [0, 64], sizes = [8, 32], strides = [1, 1]} : vector<8x128xf32> to vector<8x32xf32>
    %57 = vector.extract_strided_slice %53 {offsets = [0, 96], sizes = [8, 32], strides = [1, 1]} : vector<8x128xf32> to vector<8x32xf32>
    %58 = arith.mulf %54, %55 : vector<8x32xf32>
    %59 = arith.mulf %42, %56 : vector<8x32xf32>
    %60 = arith.addf %58, %59 : vector<8x32xf32>
    %61 = math.tanh %60 : vector<8x32xf32>
    %62 = arith.mulf %61, %57 : vector<8x32xf32>
    %63 = vector.extract_strided_slice %5 {offsets = [24, 0], sizes = [8, 128], strides = [1, 1]} : vector<64x128xf32> to vector<8x128xf32>
    %cst_15 = arith.constant dense<0.000000e+00> : vector<8x128xf32>
    %64 = tpu.matmul %62, %6, %cst_15 {dimension_numbers = #tpu.dot_dimension_numbers<[1], [0], [0], [1], [0, 0, 1, 1], [], []>} : vector<8x32xf32>, vector<32x128xf32>, vector<8x128xf32> -> vector<8x128xf32>
    %65 = arith.addf %63, %64 : vector<8x128xf32>
    %66 = math.tanh %65 : vector<8x128xf32>
    %67 = arith.negf %65 : vector<8x128xf32>
    %68 = math.exp %67 : vector<8x128xf32>
    %cst_16 = arith.constant 1.000000e+00 : f32
    %69 = vector.broadcast %cst_16 : f32 to vector<8x128xf32>
    %70 = arith.addf %69, %68 : vector<8x128xf32>
    %71 = arith.divf %69, %70 : vector<8x128xf32>
    %72 = vector.extract_strided_slice %66 {offsets = [0, 0], sizes = [8, 32], strides = [1, 1]} : vector<8x128xf32> to vector<8x32xf32>
    %73 = vector.extract_strided_slice %71 {offsets = [0, 32], sizes = [8, 32], strides = [1, 1]} : vector<8x128xf32> to vector<8x32xf32>
    %74 = vector.extract_strided_slice %71 {offsets = [0, 64], sizes = [8, 32], strides = [1, 1]} : vector<8x128xf32> to vector<8x32xf32>
    %75 = vector.extract_strided_slice %71 {offsets = [0, 96], sizes = [8, 32], strides = [1, 1]} : vector<8x128xf32> to vector<8x32xf32>
    %76 = arith.mulf %72, %73 : vector<8x32xf32>
    %77 = arith.mulf %60, %74 : vector<8x32xf32>
    %78 = arith.addf %76, %77 : vector<8x32xf32>
    %79 = math.tanh %78 : vector<8x32xf32>
    %80 = arith.mulf %79, %75 : vector<8x32xf32>
    %81 = vector.extract_strided_slice %5 {offsets = [32, 0], sizes = [8, 128], strides = [1, 1]} : vector<64x128xf32> to vector<8x128xf32>
    %cst_17 = arith.constant dense<0.000000e+00> : vector<8x128xf32>
    %82 = tpu.matmul %80, %6, %cst_17 {dimension_numbers = #tpu.dot_dimension_numbers<[1], [0], [0], [1], [0, 0, 1, 1], [], []>} : vector<8x32xf32>, vector<32x128xf32>, vector<8x128xf32> -> vector<8x128xf32>
    %83 = arith.addf %81, %82 : vector<8x128xf32>
    %84 = math.tanh %83 : vector<8x128xf32>
    %85 = arith.negf %83 : vector<8x128xf32>
    %86 = math.exp %85 : vector<8x128xf32>
    %cst_18 = arith.constant 1.000000e+00 : f32
    %87 = vector.broadcast %cst_18 : f32 to vector<8x128xf32>
    %88 = arith.addf %87, %86 : vector<8x128xf32>
    %89 = arith.divf %87, %88 : vector<8x128xf32>
    %90 = vector.extract_strided_slice %84 {offsets = [0, 0], sizes = [8, 32], strides = [1, 1]} : vector<8x128xf32> to vector<8x32xf32>
    %91 = vector.extract_strided_slice %89 {offsets = [0, 32], sizes = [8, 32], strides = [1, 1]} : vector<8x128xf32> to vector<8x32xf32>
    %92 = vector.extract_strided_slice %89 {offsets = [0, 64], sizes = [8, 32], strides = [1, 1]} : vector<8x128xf32> to vector<8x32xf32>
    %93 = vector.extract_strided_slice %89 {offsets = [0, 96], sizes = [8, 32], strides = [1, 1]} : vector<8x128xf32> to vector<8x32xf32>
    %94 = arith.mulf %90, %91 : vector<8x32xf32>
    %95 = arith.mulf %78, %92 : vector<8x32xf32>
    %96 = arith.addf %94, %95 : vector<8x32xf32>
    %97 = math.tanh %96 : vector<8x32xf32>
    %98 = arith.mulf %97, %93 : vector<8x32xf32>
    %99 = vector.extract_strided_slice %5 {offsets = [40, 0], sizes = [8, 128], strides = [1, 1]} : vector<64x128xf32> to vector<8x128xf32>
    %cst_19 = arith.constant dense<0.000000e+00> : vector<8x128xf32>
    %100 = tpu.matmul %98, %6, %cst_19 {dimension_numbers = #tpu.dot_dimension_numbers<[1], [0], [0], [1], [0, 0, 1, 1], [], []>} : vector<8x32xf32>, vector<32x128xf32>, vector<8x128xf32> -> vector<8x128xf32>
    %101 = arith.addf %99, %100 : vector<8x128xf32>
    %102 = math.tanh %101 : vector<8x128xf32>
    %103 = arith.negf %101 : vector<8x128xf32>
    %104 = math.exp %103 : vector<8x128xf32>
    %cst_20 = arith.constant 1.000000e+00 : f32
    %105 = vector.broadcast %cst_20 : f32 to vector<8x128xf32>
    %106 = arith.addf %105, %104 : vector<8x128xf32>
    %107 = arith.divf %105, %106 : vector<8x128xf32>
    %108 = vector.extract_strided_slice %102 {offsets = [0, 0], sizes = [8, 32], strides = [1, 1]} : vector<8x128xf32> to vector<8x32xf32>
    %109 = vector.extract_strided_slice %107 {offsets = [0, 32], sizes = [8, 32], strides = [1, 1]} : vector<8x128xf32> to vector<8x32xf32>
    %110 = vector.extract_strided_slice %107 {offsets = [0, 64], sizes = [8, 32], strides = [1, 1]} : vector<8x128xf32> to vector<8x32xf32>
    %111 = vector.extract_strided_slice %107 {offsets = [0, 96], sizes = [8, 32], strides = [1, 1]} : vector<8x128xf32> to vector<8x32xf32>
    %112 = arith.mulf %108, %109 : vector<8x32xf32>
    %113 = arith.mulf %96, %110 : vector<8x32xf32>
    %114 = arith.addf %112, %113 : vector<8x32xf32>
    %115 = math.tanh %114 : vector<8x32xf32>
    %116 = arith.mulf %115, %111 : vector<8x32xf32>
    %117 = vector.extract_strided_slice %5 {offsets = [48, 0], sizes = [8, 128], strides = [1, 1]} : vector<64x128xf32> to vector<8x128xf32>
    %cst_21 = arith.constant dense<0.000000e+00> : vector<8x128xf32>
    %118 = tpu.matmul %116, %6, %cst_21 {dimension_numbers = #tpu.dot_dimension_numbers<[1], [0], [0], [1], [0, 0, 1, 1], [], []>} : vector<8x32xf32>, vector<32x128xf32>, vector<8x128xf32> -> vector<8x128xf32>
    %119 = arith.addf %117, %118 : vector<8x128xf32>
    %120 = math.tanh %119 : vector<8x128xf32>
    %121 = arith.negf %119 : vector<8x128xf32>
    %122 = math.exp %121 : vector<8x128xf32>
    %cst_22 = arith.constant 1.000000e+00 : f32
    %123 = vector.broadcast %cst_22 : f32 to vector<8x128xf32>
    %124 = arith.addf %123, %122 : vector<8x128xf32>
    %125 = arith.divf %123, %124 : vector<8x128xf32>
    %126 = vector.extract_strided_slice %120 {offsets = [0, 0], sizes = [8, 32], strides = [1, 1]} : vector<8x128xf32> to vector<8x32xf32>
    %127 = vector.extract_strided_slice %125 {offsets = [0, 32], sizes = [8, 32], strides = [1, 1]} : vector<8x128xf32> to vector<8x32xf32>
    %128 = vector.extract_strided_slice %125 {offsets = [0, 64], sizes = [8, 32], strides = [1, 1]} : vector<8x128xf32> to vector<8x32xf32>
    %129 = vector.extract_strided_slice %125 {offsets = [0, 96], sizes = [8, 32], strides = [1, 1]} : vector<8x128xf32> to vector<8x32xf32>
    %130 = arith.mulf %126, %127 : vector<8x32xf32>
    %131 = arith.mulf %114, %128 : vector<8x32xf32>
    %132 = arith.addf %130, %131 : vector<8x32xf32>
    %133 = math.tanh %132 : vector<8x32xf32>
    %134 = arith.mulf %133, %129 : vector<8x32xf32>
    %135 = vector.extract_strided_slice %5 {offsets = [56, 0], sizes = [8, 128], strides = [1, 1]} : vector<64x128xf32> to vector<8x128xf32>
    %cst_23 = arith.constant dense<0.000000e+00> : vector<8x128xf32>
    %136 = tpu.matmul %134, %6, %cst_23 {dimension_numbers = #tpu.dot_dimension_numbers<[1], [0], [0], [1], [0, 0, 1, 1], [], []>} : vector<8x32xf32>, vector<32x128xf32>, vector<8x128xf32> -> vector<8x128xf32>
    %137 = arith.addf %135, %136 : vector<8x128xf32>
    %138 = math.tanh %137 : vector<8x128xf32>
    %139 = arith.negf %137 : vector<8x128xf32>
    %140 = math.exp %139 : vector<8x128xf32>
    %cst_24 = arith.constant 1.000000e+00 : f32
    %141 = vector.broadcast %cst_24 : f32 to vector<8x128xf32>
    %142 = arith.addf %141, %140 : vector<8x128xf32>
    %143 = arith.divf %141, %142 : vector<8x128xf32>
    %144 = vector.extract_strided_slice %138 {offsets = [0, 0], sizes = [8, 32], strides = [1, 1]} : vector<8x128xf32> to vector<8x32xf32>
    %145 = vector.extract_strided_slice %143 {offsets = [0, 32], sizes = [8, 32], strides = [1, 1]} : vector<8x128xf32> to vector<8x32xf32>
    %146 = vector.extract_strided_slice %143 {offsets = [0, 64], sizes = [8, 32], strides = [1, 1]} : vector<8x128xf32> to vector<8x32xf32>
    %147 = vector.extract_strided_slice %143 {offsets = [0, 96], sizes = [8, 32], strides = [1, 1]} : vector<8x128xf32> to vector<8x32xf32>
    %148 = arith.mulf %144, %145 : vector<8x32xf32>
    %149 = arith.mulf %132, %146 : vector<8x32xf32>
    %150 = arith.addf %148, %149 : vector<8x32xf32>
    %151 = math.tanh %150 : vector<8x32xf32>
    %152 = arith.mulf %151, %147 : vector<8x32xf32>
    %c0_25 = arith.constant 0 : index
    %c0_26 = arith.constant 0 : index
    %153 = vector.load %arg4[%c0_25, %c0_26] : memref<32x128xf32, #tpu.memory_space<vmem>>, vector<32x128xf32>
    %cst_27 = arith.constant dense<0.000000e+00> : vector<8x128xf32>
    %154 = tpu.matmul %152, %153, %cst_27 {dimension_numbers = #tpu.dot_dimension_numbers<[1], [0], [0], [1], [0, 0, 1, 1], [], []>} : vector<8x32xf32>, vector<32x128xf32>, vector<8x128xf32> -> vector<8x128xf32>
    %c0_28 = arith.constant 0 : index
    %c0_29 = arith.constant 0 : index
    %155 = vector.load %arg5[%c0_28, %c0_29] : memref<1x128xf32, #tpu.memory_space<vmem>>, vector<1x128xf32>
    %156 = vector.broadcast %155 : vector<1x128xf32> to vector<8x128xf32>
    %157 = arith.addf %154, %156 : vector<8x128xf32>
    %cst_30 = arith.constant dense<0xFF800000> : vector<8xf32>
    %158 = vector.multi_reduction <maximumf>, %157, %cst_30 [1] : vector<8x128xf32> to vector<8xf32>
    %159 = vector.shape_cast %158 : vector<8xf32> to vector<8x1xf32>
    %160 = vector.broadcast %159 : vector<8x1xf32> to vector<8x128xf32>
    %161 = arith.subf %157, %160 : vector<8x128xf32>
    %162 = math.exp %161 : vector<8x128xf32>
    %cst_31 = arith.constant dense<0.000000e+00> : vector<8xf32>
    %163 = vector.multi_reduction <add>, %162, %cst_31 [1] : vector<8x128xf32> to vector<8xf32>
    %164 = vector.shape_cast %163 : vector<8xf32> to vector<8x1xf32>
    %165 = math.log %164 : vector<8x1xf32>
    %166 = arith.addf %165, %159 : vector<8x1xf32>
    %167 = vector.broadcast %166 : vector<8x1xf32> to vector<8x128xf32>
    %168 = arith.subf %157, %167 : vector<8x128xf32>
    %c0_32 = arith.constant 0 : index
    %c0_33 = arith.constant 0 : index
    %169 = vector.load %arg6[%c0_32, %c0_33] : memref<8x128xf32, #tpu.memory_space<vmem>>, vector<8x128xf32>
    tpu.vector_store %arg6[%c0_32, %c0_33], %168 {strides = array<i32>} : memref<8x128xf32, #tpu.memory_space<vmem>>, vector<8x128xf32>,
    return
  }
}

</mosaic_0001>

<llo_original>
// kernel: lstm_forward.1
$region0: #{lstm_forward.1}
  #allocation0 [shape = 'u32[]', space=smem, size = 0x4, offset = 0x4, fixed_abs, tag = 'smem constant byte address 0x4 - core index']
  #allocation1 [shape = 'u32[144,128]{1,0:T(1,128)}', space=vmem, size = 0x12000, scoped, tag = 'internal scratch']
  %s0 = inlined_call_operand.vmem [shape: f32[64,16], index: 0, kind: input, shape index: {}]
  %s1 = inlined_call_operand.vmem [shape: f32[16,128], index: 1, kind: input, shape index: {}]
  %s2 = inlined_call_operand.vmem [shape: f32[32,128], index: 2, kind: input, shape index: {}]
  %s3 = inlined_call_operand.vmem [shape: f32[1,128], index: 3, kind: input, shape index: {}]
  %s4 = inlined_call_operand.vmem [shape: f32[32,128], index: 4, kind: input, shape index: {}]
  %s5 = inlined_call_operand.vmem [shape: f32[1,128], index: 5, kind: input, shape index: {}]
  %s6 = inlined_call_operand.vmem [shape: f32[8,128], index: 6, kind: output, shape index: {}]
  %s7 = sld [smem:[#allocation0]]
  $region34: #{lstm_forward.1} parent=0
    _
  %s9 = ssub.s32 1, %s7
  %s10 = scalar_select 0, %s9, %s7
  // Predicated region
  $region2: #{lstm_forward.1} parent=0 // pred_check
    _
  $region3: #{lstm_forward.1} parent=0 // pred_check_branch
    %12 = sbr.rel (0) target = $region5
  $region4: #{lstm_forward.1} parent=0 // pred_region
    _
  $region5: #{lstm_forward.1} parent=0 // pred_fallthru
    _
  // Predicated region
  $region6: #{lstm_forward.1} parent=0 // pred_check
    _
  $region7: #{lstm_forward.1} parent=0 // pred_check_branch
    %14 = sbr.rel (0) target = $region9
  $region8: #{lstm_forward.1} parent=0 // pred_region
    _
  $region9: #{lstm_forward.1} parent=0 // pred_fallthru
    _
  // Predicated region
  $region10: #{lstm_forward.1} parent=0 // pred_check
    _
  $region11: #{lstm_forward.1} parent=0 // pred_check_branch
    %16 = sbr.rel (0) target = $region13
  $region12: #{lstm_forward.1} parent=0 // pred_region
    _
  $region13: #{lstm_forward.1} parent=0 // pred_fallthru
    _
  // Predicated region
  $region14: #{lstm_forward.1} parent=0 // pred_check
    _
  $region15: #{lstm_forward.1} parent=0 // pred_check_branch
    %18 = sbr.rel (0) target = $region17
  $region16: #{lstm_forward.1} parent=0 // pred_region
    _
  $region17: #{lstm_forward.1} parent=0 // pred_fallthru
    _
  // Predicated region
  $region18: #{lstm_forward.1} parent=0 // pred_check
    _
  $region19: #{lstm_forward.1} parent=0 // pred_check_branch
    %20 = sbr.rel (0) target = $region21
  $region20: #{lstm_forward.1} parent=0 // pred_region
    _
  $region21: #{lstm_forward.1} parent=0 // pred_fallthru
    _
  // Predicated region
  $region22: #{lstm_forward.1} parent=0 // pred_check
    _
  $region23: #{lstm_forward.1} parent=0 // pred_check_branch
    %22 = sbr.rel (0) target = $region25
  $region24: #{lstm_forward.1} parent=0 // pred_region
    _
  $region25: #{lstm_forward.1} parent=0 // pred_fallthru
    _
  %v23 = vld [vmem:[%s0] sm:$0xff]
  %v24 = vld [vmem:[%s0 + $0x8] sm:$0xff]
  %v25 = vld [vmem:[%s0 + $0x10] sm:$0xff]
  %v26 = vld [vmem:[%s0 + $0x18] sm:$0xff]
  %v27 = vld [vmem:[%s0 + $0x20] sm:$0xff]
  %v28 = vld [vmem:[%s0 + $0x28] sm:$0xff]
  %v29 = vld [vmem:[%s0 + $0x30] sm:$0xff]
  %v30 = vld [vmem:[%s0 + $0x38] sm:$0xff]
  %v31 = vld [vmem:[%s1] sm:$0xff]
  %v32 = vld [vmem:[%s1 + $0x8] sm:$0xff]
  %v33 = vld [vmem:[%s3] sm:$0x1]
  %v35 = vlaneseq
  %v36 = vshrl.u32 %v35, 7
  %v37 = vsub.s32 0, %v36
  %v38 = vrot.slane %v33, %v37
  %vm40 = vcmask 130048
  %v42 = vsel %vm40, %v23, 0
  %v45 = vsel %vm40, %v24, 0
  %v48 = vsel %vm40, %v25, 0
  %v51 = vsel %vm40, %v26, 0
  %v54 = vsel %vm40, %v27, 0
  %v57 = vsel %vm40, %v28, 0
  %v60 = vsel %vm40, %v29, 0
  %v63 = vsel %vm40, %v30, 0
  %65 = vmatprep.subr.mxu0 0.0
  %66 = vmatpush1.msra.mxu0 0.0
  %67 = vmatprep.subr.mxu0 0.0
  %68 = vmatpush1.msra.mxu0 0.0
  %69 = vmatprep.subr.mxu0 0.0
  %70 = vmatpush1.msra.mxu0 0.0
  %71 = vmatprep.subr.mxu0 0.0
  %72 = vmatpush1.msra.mxu0 0.0
  %73 = vmatprep.subr.mxu0 0.0
  %74 = vmatpush1.msra.mxu0 0.0
  %75 = vmatprep.subr.mxu0 0.0
  %76 = vmatpush1.msra.mxu0 0.0
  %77 = vmatprep.subr.mxu0 0.0
  %78 = vmatpush1.msra.mxu0 0.0
  %79 = vmatprep.subr.mxu0 0.0
  %80 = vmatpush1.msra.mxu0 0.0
  %81 = vmatprep.subr.mxu0 0.0
  %82 = vmatpush1.msra.mxu0 0.0
  %83 = vmatprep.subr.mxu0 0.0
  %84 = vmatpush1.msra.mxu0 0.0
  %85 = vmatprep.subr.mxu0 0.0
  %86 = vmatpush1.msra.mxu0 0.0
  %87 = vmatprep.subr.mxu0 0.0
  %88 = vmatpush1.msra.mxu0 0.0
  %89 = vmatprep.subr.mxu0 0.0
  %90 = vmatpush1.msra.mxu0 0.0
  %91 = vmatprep.subr.mxu0 0.0
  %92 = vmatpush1.msra.mxu0 0.0
  %93 = vmatprep.subr.mxu0 0.0
  %94 = vmatpush1.msra.mxu0 %v32
  %95 = vmatprep.subr.mxu0 0.0
  %96 = vmatpush1.msra.mxu0 %v31
  %97 = vmatprep.subr.mxu0 0.0
  %98 = vmatpush2.msra.mxu0 0.0
  %99 = vmatprep.subr.mxu0 0.0
  %100 = vmatpush2.msra.mxu0 0.0
  %101 = vmatprep.subr.mxu0 0.0
  %102 = vmatpush2.msra.mxu0 0.0
  %103 = vmatprep.subr.mxu0 0.0
  %104 = vmatpush2.msra.mxu0 0.0
  %105 = vmatprep.subr.mxu0 0.0
  %106 = vmatpush2.msra.mxu0 0.0
  %107 = vmatprep.subr.mxu0 0.0
  %108 = vmatpush2.msra.mxu0 0.0
  %109 = vmatprep.subr.mxu0 0.0
  %110 = vmatpush2.msra.mxu0 0.0
  %111 = vmatprep.subr.mxu0 0.0
  %112 = vmatpush2.msra.mxu0 0.0
  %113 = vmatprep.subr.mxu0 0.0
  %114 = vmatpush2.msra.mxu0 0.0
  %115 = vmatprep.subr.mxu0 0.0
  %116 = vmatpush2.msra.mxu0 0.0
  %117 = vmatprep.subr.mxu0 0.0
  %118 = vmatpush2.msra.mxu0 0.0
  %119 = vmatprep.subr.mxu0 0.0
  %120 = vmatpush2.msra.mxu0 0.0
  %121 = vmatprep.subr.mxu0 0.0
  %122 = vmatpush2.msra.mxu0 0.0
  %123 = vmatprep.subr.mxu0 0.0
  %124 = vmatpush2.msra.mxu0 0.0
  %125 = vmatprep.subr.mxu0 0.0
  %126 = vmatpush2.msra.mxu0 0.0
  %127 = vmatprep.subr.mxu0 0.0
  %128 = vmatpush2.msra.mxu0 0.0
  %129 = vmatprep.mubr.f32.mxu0 0.0
  %130 = vmatmul.mubr.f32.gmra.mxu0 %v42
  %v131 = vpop.f32.mrf.mxu0
  %v132 = vadd.f32 %v38, %v131
  %v133 = vpop.f32.mrf.mxu0
  %134 = vmatprep.mubr.f32.mxu0 0.0
  %135 = vmatmul.mubr.f32.gmra.mxu0 %v45
  %v136 = vpop.f32.mrf.mxu0
  %v137 = vadd.f32 %v38, %v136
  %v138 = vpop.f32.mrf.mxu0
  %139 = vmatprep.mubr.f32.mxu0 0.0
  %140 = vmatmul.mubr.f32.gmra.mxu0 %v48
  %v141 = vpop.f32.mrf.mxu0
  %v142 = vadd.f32 %v38, %v141
  %v143 = vpop.f32.mrf.mxu0
  %144 = vmatprep.mubr.f32.mxu0 0.0
  %145 = vmatmul.mubr.f32.gmra.mxu0 %v51
  %v146 = vpop.f32.mrf.mxu0
  %v147 = vadd.f32 %v38, %v146
  %v148 = vpop.f32.mrf.mxu0
  %149 = vmatprep.mubr.f32.mxu0 0.0
  %150 = vmatmul.mubr.f32.gmra.mxu0 %v54
  %v151 = vpop.f32.mrf.mxu0
  %v152 = vadd.f32 %v38, %v151
  %v153 = vpop.f32.mrf.mxu0
  %154 = vmatprep.mubr.f32.mxu0 0.0
  %155 = vmatmul.mubr.f32.gmra.mxu0 %v57
  %v156 = vpop.f32.mrf.mxu0
  %v157 = vadd.f32 %v38, %v156
  %v158 = vpop.f32.mrf.mxu0
  %159 = vmatprep.mubr.f32.mxu0 0.0
  %160 = vmatmul.mubr.f32.gmra.mxu0 %v60
  %v161 = vpop.f32.mrf.mxu0
  %v162 = vadd.f32 %v38, %v161
  %v163 = vpop.f32.mrf.mxu0
  %164 = vmatprep.mubr.f32.mxu0 0.0
  %165 = vmatmul.mubr.f32.gmra.mxu0 %v63
  %v166 = vpop.f32.mrf.mxu0
  %v167 = vadd.f32 %v38, %v166
  %v168 = vpop.f32.mrf.mxu0
  %169 = vdwg.mxu0
  %v170 = vld [vmem:[%s2] sm:$0xff]
  %v171 = vld [vmem:[%s2 + $0x8] sm:$0xff]
  %v172 = vld [vmem:[%s2 + $0x10] sm:$0xff]
  %v173 = vld [vmem:[%s2 + $0x18] sm:$0xff]
  %vm174 = vcmask 261120
  %v176 = vsel %vm174, 0.0, 0
  %178 = vmatprep.subr.mxu0 0.0
  %179 = vmatpush1.msra.mxu0 0.0
  %180 = vmatprep.subr.mxu0 0.0
  %181 = vmatpush1.msra.mxu0 0.0
  %182 = vmatprep.subr.mxu0 0.0
  %183 = vmatpush1.msra.mxu0 0.0
  %184 = vmatprep.subr.mxu0 0.0
  %185 = vmatpush1.msra.mxu0 0.0
  %186 = vmatprep.subr.mxu0 0.0
  %187 = vmatpush1.msra.mxu0 0.0
  %188 = vmatprep.subr.mxu0 0.0
  %189 = vmatpush1.msra.mxu0 0.0
  %190 = vmatprep.subr.mxu0 0.0
  %191 = vmatpush1.msra.mxu0 0.0
  %192 = vmatprep.subr.mxu0 0.0
  %193 = vmatpush1.msra.mxu0 0.0
  %194 = vmatprep.subr.mxu0 0.0
  %195 = vmatpush1.msra.mxu0 0.0
  %196 = vmatprep.subr.mxu0 0.0
  %197 = vmatpush1.msra.mxu0 0.0
  %198 = vmatprep.subr.mxu0 0.0
  %199 = vmatpush1.msra.mxu0 0.0
  %200 = vmatprep.subr.mxu0 0.0
  %201 = vmatpush1.msra.mxu0 0.0
  %202 = vmatprep.subr.mxu0 0.0
  %203 = vmatpush1.msra.mxu0 %v173
  %204 = vmatprep.subr.mxu0 0.0
  %205 = vmatpush1.msra.mxu0 %v172
  %206 = vmatprep.subr.mxu0 0.0
  %207 = vmatpush1.msra.mxu0 %v171
  %208 = vmatprep.subr.mxu0 0.0
  %209 = vmatpush1.msra.mxu0 %v170
  %210 = vmatprep.subr.mxu0 0.0
  %211 = vmatpush2.msra.mxu0 0.0
  %212 = vmatprep.subr.mxu0 0.0
  %213 = vmatpush2.msra.mxu0 0.0
  %214 = vmatprep.subr.mxu0 0.0
  %215 = vmatpush2.msra.mxu0 0.0
  %216 = vmatprep.subr.mxu0 0.0
  %217 = vmatpush2.msra.mxu0 0.0
  %218 = vmatprep.subr.mxu0 0.0
  %219 = vmatpush2.msra.mxu0 0.0
  %220 = vmatprep.subr.mxu0 0.0
  %221 = vmatpush2.msra.mxu0 0.0
  %222 = vmatprep.subr.mxu0 0.0
  %223 = vmatpush2.msra.mxu0 0.0
  %224 = vmatprep.subr.mxu0 0.0
  %225 = vmatpush2.msra.mxu0 0.0
  %226 = vmatprep.subr.mxu0 0.0
  %227 = vmatpush2.msra.mxu0 0.0
  %228 = vmatprep.subr.mxu0 0.0
  %229 = vmatpush2.msra.mxu0 0.0
  %230 = vmatprep.subr.mxu0 0.0
  %231 = vmatpush2.msra.mxu0 0.0
  %232 = vmatprep.subr.mxu0 0.0
  %233 = vmatpush2.msra.mxu0 0.0
  %234 = vmatprep.subr.mxu0 0.0
  %235 = vmatpush2.msra.mxu0 0.0
  %236 = vmatprep.subr.mxu0 0.0
  %237 = vmatpush2.msra.mxu0 0.0
  %238 = vmatprep.subr.mxu0 0.0
  %239 = vmatpush2.msra.mxu0 0.0
  %240 = vmatprep.subr.mxu0 0.0
  %241 = vmatpush2.msra.mxu0 0.0
  %242 = vmatprep.mubr.f32.mxu0 0.0
  %243 = vmatmul.mubr.f32.gmra.mxu0 %v176
  %v244 = vpop.f32.mrf.mxu0
  %v245 = vadd.f32 0.0, %v244
  %v246 = vpop.f32.mrf.mxu0
  %247 = vdwg.mxu0
  %v248 = vadd.f32 %v132, %v245
  %v249 = vtanh.pop %v248
  %v250 = vxor.u32 %v248, 2147483648
  %v251 = vmul.f32 %v250, 1.442695
  %v252 = vpow.pop %v251
  %v253 = vadd.f32 %v252, 1.0
  %v254 = vrcp.pop %v253
  %v255 = vmul.f32 1.0, %v254
  %257 = vrot.lane.b32.xlu0 %v255, 96
  %v258 = vpop.permute.xlu0 %257
  %v260 = vmul.f32 %v249, %v258
  %v261 = vmul.f32 %v255, 0.0
  %263 = vrot.lane.b32.xlu0 %v261, 64
  %v264 = vpop.permute.xlu0 %263
  %v266 = vadd.f32 %v260, %v264
  %v267 = vtanh.pop %v266
  %268 = vrot.lane.b32.xlu0 %v255, 32
  %v269 = vpop.permute.xlu0 %268
  %v271 = vmul.f32 %v267, %v269
  %v273 = vsel %vm174, %v271, 0
  %275 = vmatprep.subr.mxu0 0.0
  %276 = vmatpush1.msra.mxu0 0.0
  %277 = vmatprep.subr.mxu0 0.0
  %278 = vmatpush1.msra.mxu0 0.0
  %279 = vmatprep.subr.mxu0 0.0
  %280 = vmatpush1.msra.mxu0 0.0
  %281 = vmatprep.subr.mxu0 0.0
  %282 = vmatpush1.msra.mxu0 0.0
  %283 = vmatprep.subr.mxu0 0.0
  %284 = vmatpush1.msra.mxu0 0.0
  %285 = vmatprep.subr.mxu0 0.0
  %286 = vmatpush1.msra.mxu0 0.0
  %287 = vmatprep.subr.mxu0 0.0
  %288 = vmatpush1.msra.mxu0 0.0
  %289 = vmatprep.subr.mxu0 0.0
  %290 = vmatpush1.msra.mxu0 0.0
  %291 = vmatprep.subr.mxu0 0.0
  %292 = vmatpush1.msra.mxu0 0.0
  %293 = vmatprep.subr.mxu0 0.0
  %294 = vmatpush1.msra.mxu0 0.0
  %295 = vmatprep.subr.mxu0 0.0
  %296 = vmatpush1.msra.mxu0 0.0
  %297 = vmatprep.subr.mxu0 0.0
  %298 = vmatpush1.msra.mxu0 0.0
  %299 = vmatprep.subr.mxu0 0.0
  %300 = vmatpush1.msra.mxu0 %v173
  %301 = vmatprep.subr.mxu0 0.0
  %302 = vmatpush1.msra.mxu0 %v172
  %303 = vmatprep.subr.mxu0 0.0
  %304 = vmatpush1.msra.mxu0 %v171
  %305 = vmatprep.subr.mxu0 0.0
  %306 = vmatpush1.msra.mxu0 %v170
  %307 = vmatprep.subr.mxu0 0.0
  %308 = vmatpush2.msra.mxu0 0.0
  %309 = vmatprep.subr.mxu0 0.0
  %310 = vmatpush2.msra.mxu0 0.0
  %311 = vmatprep.subr.mxu0 0.0
  %312 = vmatpush2.msra.mxu0 0.0
  %313 = vmatprep.subr.mxu0 0.0
  %314 = vmatpush2.msra.mxu0 0.0
  %315 = vmatprep.subr.mxu0 0.0
  %316 = vmatpush2.msra.mxu0 0.0
  %317 = vmatprep.subr.mxu0 0.0
  %318 = vmatpush2.msra.mxu0 0.0
  %319 = vmatprep.subr.mxu0 0.0
  %320 = vmatpush2.msra.mxu0 0.0
  %321 = vmatprep.subr.mxu0 0.0
  %322 = vmatpush2.msra.mxu0 0.0
  %323 = vmatprep.subr.mxu0 0.0
  %324 = vmatpush2.msra.mxu0 0.0
  %325 = vmatprep.subr.mxu0 0.0
  %326 = vmatpush2.msra.mxu0 0.0
  %327 = vmatprep.subr.mxu0 0.0
  %328 = vmatpush2.msra.mxu0 0.0
  %329 = vmatprep.subr.mxu0 0.0
  %330 = vmatpush2.msra.mxu0 0.0
  %331 = vmatprep.subr.mxu0 0.0
  %332 = vmatpush2.msra.mxu0 0.0
  %333 = vmatprep.subr.mxu0 0.0
  %334 = vmatpush2.msra.mxu0 0.0
  %335 = vmatprep.subr.mxu0 0.0
  %336 = vmatpush2.msra.mxu0 0.0
  %337 = vmatprep.subr.mxu0 0.0
  %338 = vmatpush2.msra.mxu0 0.0
  %339 = vmatprep.mubr.f32.mxu0 0.0
  %340 = vmatmul.mubr.f32.gmra.mxu0 %v273
  %v341 = vpop.f32.mrf.mxu0
  %v342 = vadd.f32 0.0, %v341
  %v343 = vpop.f32.mrf.mxu0
  %344 = vdwg.mxu0
  %v345 = vadd.f32 %v137, %v342
  %v346 = vtanh.pop %v345
  %v347 = vxor.u32 %v345, 2147483648
  %v348 = vmul.f32 %v347, 1.442695
  %v349 = vpow.pop %v348
  %v350 = vadd.f32 %v349, 1.0
  %v351 = vrcp.pop %v350
  %v352 = vmul.f32 1.0, %v351
  %354 = vrot.lane.b32.xlu0 %v352, 96
  %v355 = vpop.permute.xlu0 %354
  %v357 = vmul.f32 %v346, %v355
  %358 = vrot.lane.b32.xlu0 %v352, 64
  %v359 = vpop.permute.xlu0 %358
  %v361 = vmul.f32 %v266, %v359
  %v362 = vadd.f32 %v357, %v361
  %v363 = vtanh.pop %v362
  %364 = vrot.lane.b32.xlu0 %v352, 32
  %v365 = vpop.permute.xlu0 %364
  %v367 = vmul.f32 %v363, %v365
  %v369 = vsel %vm174, %v367, 0
  %371 = vmatprep.subr.mxu0 0.0
  %372 = vmatpush1.msra.mxu0 0.0
  %373 = vmatprep.subr.mxu0 0.0
  %374 = vmatpush1.msra.mxu0 0.0
  %375 = vmatprep.subr.mxu0 0.0
  %376 = vmatpush1.msra.mxu0 0.0
  %377 = vmatprep.subr.mxu0 0.0
  %378 = vmatpush1.msra.mxu0 0.0
  %379 = vmatprep.subr.mxu0 0.0
  %380 = vmatpush1.msra.mxu0 0.0
  %381 = vmatprep.subr.mxu0 0.0
  %382 = vmatpush1.msra.mxu0 0.0
  %383 = vmatprep.subr.mxu0 0.0
  %384 = vmatpush1.msra.mxu0 0.0
  %385 = vmatprep.subr.mxu0 0.0
  %386 = vmatpush1.msra.mxu0 0.0
  %387 = vmatprep.subr.mxu0 0.0
  %388 = vmatpush1.msra.mxu0 0.0
  %389 = vmatprep.subr.mxu0 0.0
  %390 = vmatpush1.msra.mxu0 0.0
  %391 = vmatprep.subr.mxu0 0.0
  %392 = vmatpush1.msra.mxu0 0.0
  %393 = vmatprep.subr.mxu0 0.0
  %394 = vmatpush1.msra.mxu0 0.0
  %395 = vmatprep.subr.mxu0 0.0
  %396 = vmatpush1.msra.mxu0 %v173
  %397 = vmatprep.subr.mxu0 0.0
  %398 = vmatpush1.msra.mxu0 %v172
  %399 = vmatprep.subr.mxu0 0.0
  %400 = vmatpush1.msra.mxu0 %v171
  %401 = vmatprep.subr.mxu0 0.0
  %402 = vmatpush1.msra.mxu0 %v170
  %403 = vmatprep.subr.mxu0 0.0
  %404 = vmatpush2.msra.mxu0 0.0
  %405 = vmatprep.subr.mxu0 0.0
  %406 = vmatpush2.msra.mxu0 0.0
  %407 = vmatprep.subr.mxu0 0.0
  %408 = vmatpush2.msra.mxu0 0.0
  %409 = vmatprep.subr.mxu0 0.0
  %410 = vmatpush2.msra.mxu0 0.0
  %411 = vmatprep.subr.mxu0 0.0
  %412 = vmatpush2.msra.mxu0 0.0
  %413 = vmatprep.subr.mxu0 0.0
  %414 = vmatpush2.msra.mxu0 0.0
  %415 = vmatprep.subr.mxu0 0.0
  %416 = vmatpush2.msra.mxu0 0.0
  %417 = vmatprep.subr.mxu0 0.0
  %418 = vmatpush2.msra.mxu0 0.0
  %419 = vmatprep.subr.mxu0 0.0
  %420 = vmatpush2.msra.mxu0 0.0
  %421 = vmatprep.subr.mxu0 0.0
  %422 = vmatpush2.msra.mxu0 0.0
  %423 = vmatprep.subr.mxu0 0.0
  %424 = vmatpush2.msra.mxu0 0.0
  %425 = vmatprep.subr.mxu0 0.0
  %426 = vmatpush2.msra.mxu0 0.0
  %427 = vmatprep.subr.mxu0 0.0
  %428 = vmatpush2.msra.mxu0 0.0
  %429 = vmatprep.subr.mxu0 0.0
  %430 = vmatpush2.msra.mxu0 0.0
  %431 = vmatprep.subr.mxu0 0.0
  %432 = vmatpush2.msra.mxu0 0.0
  %433 = vmatprep.subr.mxu0 0.0
  %434 = vmatpush2.msra.mxu0 0.0
  %435 = vmatprep.mubr.f32.mxu0 0.0
  %436 = vmatmul.mubr.f32.gmra.mxu0 %v369
  %v437 = vpop.f32.mrf.mxu0
  %v438 = vadd.f32 0.0, %v437
  %v439 = vpop.f32.mrf.mxu0
  %440 = vdwg.mxu0
  %v441 = vadd.f32 %v142, %v438
  %v442 = vtanh.pop %v441
  %v443 = vxor.u32 %v441, 2147483648
  %v444 = vmul.f32 %v443, 1.442695
  %v445 = vpow.pop %v444
  %v446 = vadd.f32 %v445, 1.0
  %v447 = vrcp.pop %v446
  %v448 = vmul.f32 1.0, %v447
  %450 = vrot.lane.b32.xlu0 %v448, 96
  %v451 = vpop.permute.xlu0 %450
  %v453 = vmul.f32 %v442, %v451
  %454 = vrot.lane.b32.xlu0 %v448, 64
  %v455 = vpop.permute.xlu0 %454
  %v457 = vmul.f32 %v362, %v455
  %v458 = vadd.f32 %v453, %v457
  %v459 = vtanh.pop %v458
  %460 = vrot.lane.b32.xlu0 %v448, 32
  %v461 = vpop.permute.xlu0 %460
  %v463 = vmul.f32 %v459, %v461
  %v465 = vsel %vm174, %v463, 0
  %467 = vmatprep.subr.mxu0 0.0
  %468 = vmatpush1.msra.mxu0 0.0
  %469 = vmatprep.subr.mxu0 0.0
  %470 = vmatpush1.msra.mxu0 0.0
  %471 = vmatprep.subr.mxu0 0.0
  %472 = vmatpush1.msra.mxu0 0.0
  %473 = vmatprep.subr.mxu0 0.0
  %474 = vmatpush1.msra.mxu0 0.0
  %475 = vmatprep.subr.mxu0 0.0
  %476 = vmatpush1.msra.mxu0 0.0
  %477 = vmatprep.subr.mxu0 0.0
  %478 = vmatpush1.msra.mxu0 0.0
  %479 = vmatprep.subr.mxu0 0.0
  %480 = vmatpush1.msra.mxu0 0.0
  %481 = vmatprep.subr.mxu0 0.0
  %482 = vmatpush1.msra.mxu0 0.0
  %483 = vmatprep.subr.mxu0 0.0
  %484 = vmatpush1.msra.mxu0 0.0
  %485 = vmatprep.subr.mxu0 0.0
  %486 = vmatpush1.msra.mxu0 0.0
  %487 = vmatprep.subr.mxu0 0.0
  %488 = vmatpush1.msra.mxu0 0.0
  %489 = vmatprep.subr.mxu0 0.0
  %490 = vmatpush1.msra.mxu0 0.0
  %491 = vmatprep.subr.mxu0 0.0
  %492 = vmatpush1.msra.mxu0 %v173
  %493 = vmatprep.subr.mxu0 0.0
  %494 = vmatpush1.msra.mxu0 %v172
  %495 = vmatprep.subr.mxu0 0.0
  %496 = vmatpush1.msra.mxu0 %v171
  %497 = vmatprep.subr.mxu0 0.0
  %498 = vmatpush1.msra.mxu0 %v170
  %499 = vmatprep.subr.mxu0 0.0
  %500 = vmatpush2.msra.mxu0 0.0
  %501 = vmatprep.subr.mxu0 0.0
  %502 = vmatpush2.msra.mxu0 0.0
  %503 = vmatprep.subr.mxu0 0.0
  %504 = vmatpush2.msra.mxu0 0.0
  %505 = vmatprep.subr.mxu0 0.0
  %506 = vmatpush2.msra.mxu0 0.0
  %507 = vmatprep.subr.mxu0 0.0
  %508 = vmatpush2.msra.mxu0 0.0
  %509 = vmatprep.subr.mxu0 0.0
  %510 = vmatpush2.msra.mxu0 0.0
  %511 = vmatprep.subr.mxu0 0.0
  %512 = vmatpush2.msra.mxu0 0.0
  %513 = vmatprep.subr.mxu0 0.0
  %514 = vmatpush2.msra.mxu0 0.0
  %515 = vmatprep.subr.mxu0 0.0
  %516 = vmatpush2.msra.mxu0 0.0
  %517 = vmatprep.subr.mxu0 0.0
  %518 = vmatpush2.msra.mxu0 0.0
  %519 = vmatprep.subr.mxu0 0.0
  %520 = vmatpush2.msra.mxu0 0.0
  %521 = vmatprep.subr.mxu0 0.0
  %522 = vmatpush2.msra.mxu0 0.0
  %523 = vmatprep.subr.mxu0 0.0
  %524 = vmatpush2.msra.mxu0 0.0
  %525 = vmatprep.subr.mxu0 0.0
  %526 = vmatpush2.msra.mxu0 0.0
  %527 = vmatprep.subr.mxu0 0.0
  %528 = vmatpush2.msra.mxu0 0.0
  %529 = vmatprep.subr.mxu0 0.0
  %530 = vmatpush2.msra.mxu0 0.0
  %531 = vmatprep.mubr.f32.mxu0 0.0
  %532 = vmatmul.mubr.f32.gmra.mxu0 %v465
  %v533 = vpop.f32.mrf.mxu0
  %v534 = vadd.f32 0.0, %v533
  %v535 = vpop.f32.mrf.mxu0
  %536 = vdwg.mxu0
  %v537 = vadd.f32 %v147, %v534
  %v538 = vtanh.pop %v537
  %v539 = vxor.u32 %v537, 2147483648
  %v540 = vmul.f32 %v539, 1.442695
  %v541 = vpow.pop %v540
  %v542 = vadd.f32 %v541, 1.0
  %v543 = vrcp.pop %v542
  %v544 = vmul.f32 1.0, %v543
  %546 = vrot.lane.b32.xlu0 %v544, 96
  %v547 = vpop.permute.xlu0 %546
  %v549 = vmul.f32 %v538, %v547
  %550 = vrot.lane.b32.xlu0 %v544, 64
  %v551 = vpop.permute.xlu0 %550
  %v553 = vmul.f32 %v458, %v551
  %v554 = vadd.f32 %v549, %v553
  %v555 = vtanh.pop %v554
  %556 = vrot.lane.b32.xlu0 %v544, 32
  %v557 = vpop.permute.xlu0 %556
  %v559 = vmul.f32 %v555, %v557
  %v561 = vsel %vm174, %v559, 0
  %563 = vmatprep.subr.mxu0 0.0
  %564 = vmatpush1.msra.mxu0 0.0
  %565 = vmatprep.subr.mxu0 0.0
  %566 = vmatpush1.msra.mxu0 0.0
  %567 = vmatprep.subr.mxu0 0.0
  %568 = vmatpush1.msra.mxu0 0.0
  %569 = vmatprep.subr.mxu0 0.0
  %570 = vmatpush1.msra.mxu0 0.0
  %571 = vmatprep.subr.mxu0 0.0
  %572 = vmatpush1.msra.mxu0 0.0
  %573 = vmatprep.subr.mxu0 0.0
  %574 = vmatpush1.msra.mxu0 0.0
  %575 = vmatprep.subr.mxu0 0.0
  %576 = vmatpush1.msra.mxu0 0.0
  %577 = vmatprep.subr.mxu0 0.0
  %578 = vmatpush1.msra.mxu0 0.0
  %579 = vmatprep.subr.mxu0 0.0
  %580 = vmatpush1.msra.mxu0 0.0
  %581 = vmatprep.subr.mxu0 0.0
  %582 = vmatpush1.msra.mxu0 0.0
  %583 = vmatprep.subr.mxu0 0.0
  %584 = vmatpush1.msra.mxu0 0.0
  %585 = vmatprep.subr.mxu0 0.0
  %586 = vmatpush1.msra.mxu0 0.0
  %587 = vmatprep.subr.mxu0 0.0
  %588 = vmatpush1.msra.mxu0 %v173
  %589 = vmatprep.subr.mxu0 0.0
  %590 = vmatpush1.msra.mxu0 %v172
  %591 = vmatprep.subr.mxu0 0.0
  %592 = vmatpush1.msra.mxu0 %v171
  %593 = vmatprep.subr.mxu0 0.0
  %594 = vmatpush1.msra.mxu0 %v170
  %595 = vmatprep.subr.mxu0 0.0
  %596 = vmatpush2.msra.mxu0 0.0
  %597 = vmatprep.subr.mxu0 0.0
  %598 = vmatpush2.msra.mxu0 0.0
  %599 = vmatprep.subr.mxu0 0.0
  %600 = vmatpush2.msra.mxu0 0.0
  %601 = vmatprep.subr.mxu0 0.0
  %602 = vmatpush2.msra.mxu0 0.0
  %603 = vmatprep.subr.mxu0 0.0
  %604 = vmatpush2.msra.mxu0 0.0
  %605 = vmatprep.subr.mxu0 0.0
  %606 = vmatpush2.msra.mxu0 0.0
  %607 = vmatprep.subr.mxu0 0.0
  %608 = vmatpush2.msra.mxu0 0.0
  %609 = vmatprep.subr.mxu0 0.0
  %610 = vmatpush2.msra.mxu0 0.0
  %611 = vmatprep.subr.mxu0 0.0
  %612 = vmatpush2.msra.mxu0 0.0
  %613 = vmatprep.subr.mxu0 0.0
  %614 = vmatpush2.msra.mxu0 0.0
  %615 = vmatprep.subr.mxu0 0.0
  %616 = vmatpush2.msra.mxu0 0.0
  %617 = vmatprep.subr.mxu0 0.0
  %618 = vmatpush2.msra.mxu0 0.0
  %619 = vmatprep.subr.mxu0 0.0
  %620 = vmatpush2.msra.mxu0 0.0
  %621 = vmatprep.subr.mxu0 0.0
  %622 = vmatpush2.msra.mxu0 0.0
  %623 = vmatprep.subr.mxu0 0.0
  %624 = vmatpush2.msra.mxu0 0.0
  %625 = vmatprep.subr.mxu0 0.0
  %626 = vmatpush2.msra.mxu0 0.0
  %627 = vmatprep.mubr.f32.mxu0 0.0
  %628 = vmatmul.mubr.f32.gmra.mxu0 %v561
  %v629 = vpop.f32.mrf.mxu0
  %v630 = vadd.f32 0.0, %v629
  %v631 = vpop.f32.mrf.mxu0
  %632 = vdwg.mxu0
  %v633 = vadd.f32 %v152, %v630
  %v634 = vtanh.pop %v633
  %v635 = vxor.u32 %v633, 2147483648
  %v636 = vmul.f32 %v635, 1.442695
  %v637 = vpow.pop %v636
  %v638 = vadd.f32 %v637, 1.0
  %v639 = vrcp.pop %v638
  %v640 = vmul.f32 1.0, %v639
  %642 = vrot.lane.b32.xlu0 %v640, 96
  %v643 = vpop.permute.xlu0 %642
  %v645 = vmul.f32 %v634, %v643
  %646 = vrot.lane.b32.xlu0 %v640, 64
  %v647 = vpop.permute.xlu0 %646
  %v649 = vmul.f32 %v554, %v647
  %v650 = vadd.f32 %v645, %v649
  %v651 = vtanh.pop %v650
  %652 = vrot.lane.b32.xlu0 %v640, 32
  %v653 = vpop.permute.xlu0 %652
  %v655 = vmul.f32 %v651, %v653
  %v657 = vsel %vm174, %v655, 0
  %659 = vmatprep.subr.mxu0 0.0
  %660 = vmatpush1.msra.mxu0 0.0
  %661 = vmatprep.subr.mxu0 0.0
  %662 = vmatpush1.msra.mxu0 0.0
  %663 = vmatprep.subr.mxu0 0.0
  %664 = vmatpush1.msra.mxu0 0.0
  %665 = vmatprep.subr.mxu0 0.0
  %666 = vmatpush1.msra.mxu0 0.0
  %667 = vmatprep.subr.mxu0 0.0
  %668 = vmatpush1.msra.mxu0 0.0
  %669 = vmatprep.subr.mxu0 0.0
  %670 = vmatpush1.msra.mxu0 0.0
  %671 = vmatprep.subr.mxu0 0.0
  %672 = vmatpush1.msra.mxu0 0.0
  %673 = vmatprep.subr.mxu0 0.0
  %674 = vmatpush1.msra.mxu0 0.0
  %675 = vmatprep.subr.mxu0 0.0
  %676 = vmatpush1.msra.mxu0 0.0
  %677 = vmatprep.subr.mxu0 0.0
  %678 = vmatpush1.msra.mxu0 0.0
  %679 = vmatprep.subr.mxu0 0.0
  %680 = vmatpush1.msra.mxu0 0.0
  %681 = vmatprep.subr.mxu0 0.0
  %682 = vmatpush1.msra.mxu0 0.0
  %683 = vmatprep.subr.mxu0 0.0
  %684 = vmatpush1.msra.mxu0 %v173
  %685 = vmatprep.subr.mxu0 0.0
  %686 = vmatpush1.msra.mxu0 %v172
  %687 = vmatprep.subr.mxu0 0.0
  %688 = vmatpush1.msra.mxu0 %v171
  %689 = vmatprep.subr.mxu0 0.0
  %690 = vmatpush1.msra.mxu0 %v170
  %691 = vmatprep.subr.mxu0 0.0
  %692 = vmatpush2.msra.mxu0 0.0
  %693 = vmatprep.subr.mxu0 0.0
  %694 = vmatpush2.msra.mxu0 0.0
  %695 = vmatprep.subr.mxu0 0.0
  %696 = vmatpush2.msra.mxu0 0.0
  %697 = vmatprep.subr.mxu0 0.0
  %698 = vmatpush2.msra.mxu0 0.0
  %699 = vmatprep.subr.mxu0 0.0
  %700 = vmatpush2.msra.mxu0 0.0
  %701 = vmatprep.subr.mxu0 0.0
  %702 = vmatpush2.msra.mxu0 0.0
  %703 = vmatprep.subr.mxu0 0.0
  %704 = vmatpush2.msra.mxu0 0.0
  %705 = vmatprep.subr.mxu0 0.0
  %706 = vmatpush2.msra.mxu0 0.0
  %707 = vmatprep.subr.mxu0 0.0
  %708 = vmatpush2.msra.mxu0 0.0
  %709 = vmatprep.subr.mxu0 0.0
  %710 = vmatpush2.msra.mxu0 0.0
  %711 = vmatprep.subr.mxu0 0.0
  %712 = vmatpush2.msra.mxu0 0.0
  %713 = vmatprep.subr.mxu0 0.0
  %714 = vmatpush2.msra.mxu0 0.0
  %715 = vmatprep.subr.mxu0 0.0
  %716 = vmatpush2.msra.mxu0 0.0
  %717 = vmatprep.subr.mxu0 0.0
  %718 = vmatpush2.msra.mxu0 0.0
  %719 = vmatprep.subr.mxu0 0.0
  %720 = vmatpush2.msra.mxu0 0.0
  %721 = vmatprep.subr.mxu0 0.0
  %722 = vmatpush2.msra.mxu0 0.0
  %723 = vmatprep.mubr.f32.mxu0 0.0
  %724 = vmatmul.mubr.f32.gmra.mxu0 %v657
  %v725 = vpop.f32.mrf.mxu0
  %v726 = vadd.f32 0.0, %v725
  %v727 = vpop.f32.mrf.mxu0
  %728 = vdwg.mxu0
  %v729 = vadd.f32 %v157, %v726
  %v730 = vtanh.pop %v729
  %v731 = vxor.u32 %v729, 2147483648
  %v732 = vmul.f32 %v731, 1.442695
  %v733 = vpow.pop %v732
  %v734 = vadd.f32 %v733, 1.0
  %v735 = vrcp.pop %v734
  %v736 = vmul.f32 1.0, %v735
  %738 = vrot.lane.b32.xlu0 %v736, 96
  %v739 = vpop.permute.xlu0 %738
  %v741 = vmul.f32 %v730, %v739
  %742 = vrot.lane.b32.xlu0 %v736, 64
  %v743 = vpop.permute.xlu0 %742
  %v745 = vmul.f32 %v650, %v743
  %v746 = vadd.f32 %v741, %v745
  %v747 = vtanh.pop %v746
  %748 = vrot.lane.b32.xlu0 %v736, 32
  %v749 = vpop.permute.xlu0 %748
  %v751 = vmul.f32 %v747, %v749
  %v753 = vsel %vm174, %v751, 0
  %755 = vmatprep.subr.mxu0 0.0
  %756 = vmatpush1.msra.mxu0 0.0
  %757 = vmatprep.subr.mxu0 0.0
  %758 = vmatpush1.msra.mxu0 0.0
  %759 = vmatprep.subr.mxu0 0.0
  %760 = vmatpush1.msra.mxu0 0.0
  %761 = vmatprep.subr.mxu0 0.0
  %762 = vmatpush1.msra.mxu0 0.0
  %763 = vmatprep.subr.mxu0 0.0
  %764 = vmatpush1.msra.mxu0 0.0
  %765 = vmatprep.subr.mxu0 0.0
  %766 = vmatpush1.msra.mxu0 0.0
  %767 = vmatprep.subr.mxu0 0.0
  %768 = vmatpush1.msra.mxu0 0.0
  %769 = vmatprep.subr.mxu0 0.0
  %770 = vmatpush1.msra.mxu0 0.0
  %771 = vmatprep.subr.mxu0 0.0
  %772 = vmatpush1.msra.mxu0 0.0
  %773 = vmatprep.subr.mxu0 0.0
  %774 = vmatpush1.msra.mxu0 0.0
  %775 = vmatprep.subr.mxu0 0.0
  %776 = vmatpush1.msra.mxu0 0.0
  %777 = vmatprep.subr.mxu0 0.0
  %778 = vmatpush1.msra.mxu0 0.0
  %779 = vmatprep.subr.mxu0 0.0
  %780 = vmatpush1.msra.mxu0 %v173
  %781 = vmatprep.subr.mxu0 0.0
  %782 = vmatpush1.msra.mxu0 %v172
  %783 = vmatprep.subr.mxu0 0.0
  %784 = vmatpush1.msra.mxu0 %v171
  %785 = vmatprep.subr.mxu0 0.0
  %786 = vmatpush1.msra.mxu0 %v170
  %787 = vmatprep.subr.mxu0 0.0
  %788 = vmatpush2.msra.mxu0 0.0
  %789 = vmatprep.subr.mxu0 0.0
  %790 = vmatpush2.msra.mxu0 0.0
  %791 = vmatprep.subr.mxu0 0.0
  %792 = vmatpush2.msra.mxu0 0.0
  %793 = vmatprep.subr.mxu0 0.0
  %794 = vmatpush2.msra.mxu0 0.0
  %795 = vmatprep.subr.mxu0 0.0
  %796 = vmatpush2.msra.mxu0 0.0
  %797 = vmatprep.subr.mxu0 0.0
  %798 = vmatpush2.msra.mxu0 0.0
  %799 = vmatprep.subr.mxu0 0.0
  %800 = vmatpush2.msra.mxu0 0.0
  %801 = vmatprep.subr.mxu0 0.0
  %802 = vmatpush2.msra.mxu0 0.0
  %803 = vmatprep.subr.mxu0 0.0
  %804 = vmatpush2.msra.mxu0 0.0
  %805 = vmatprep.subr.mxu0 0.0
  %806 = vmatpush2.msra.mxu0 0.0
  %807 = vmatprep.subr.mxu0 0.0
  %808 = vmatpush2.msra.mxu0 0.0
  %809 = vmatprep.subr.mxu0 0.0
  %810 = vmatpush2.msra.mxu0 0.0
  %811 = vmatprep.subr.mxu0 0.0
  %812 = vmatpush2.msra.mxu0 0.0
  %813 = vmatprep.subr.mxu0 0.0
  %814 = vmatpush2.msra.mxu0 0.0
  %815 = vmatprep.subr.mxu0 0.0
  %816 = vmatpush2.msra.mxu0 0.0
  %817 = vmatprep.subr.mxu0 0.0
  %818 = vmatpush2.msra.mxu0 0.0
  %819 = vmatprep.mubr.f32.mxu0 0.0
  %820 = vmatmul.mubr.f32.gmra.mxu0 %v753
  %v821 = vpop.f32.mrf.mxu0
  %v822 = vadd.f32 0.0, %v821
  %v823 = vpop.f32.mrf.mxu0
  %824 = vdwg.mxu0
  %v825 = vadd.f32 %v162, %v822
  %v826 = vtanh.pop %v825
  %v827 = vxor.u32 %v825, 2147483648
  %v828 = vmul.f32 %v827, 1.442695
  %v829 = vpow.pop %v828
  %v830 = vadd.f32 %v829, 1.0
  %v831 = vrcp.pop %v830
  %v832 = vmul.f32 1.0, %v831
  %834 = vrot.lane.b32.xlu0 %v832, 96
  %v835 = vpop.permute.xlu0 %834
  %v837 = vmul.f32 %v826, %v835
  %838 = vrot.lane.b32.xlu0 %v832, 64
  %v839 = vpop.permute.xlu0 %838
  %v841 = vmul.f32 %v746, %v839
  %v842 = vadd.f32 %v837, %v841
  %v843 = vtanh.pop %v842
  %844 = vrot.lane.b32.xlu0 %v832, 32
  %v845 = vpop.permute.xlu0 %844
  %v847 = vmul.f32 %v843, %v845
  %v849 = vsel %vm174, %v847, 0
  %851 = vmatprep.subr.mxu0 0.0
  %852 = vmatpush1.msra.mxu0 0.0
  %853 = vmatprep.subr.mxu0 0.0
  %854 = vmatpush1.msra.mxu0 0.0
  %855 = vmatprep.subr.mxu0 0.0
  %856 = vmatpush1.msra.mxu0 0.0
  %857 = vmatprep.subr.mxu0 0.0
  %858 = vmatpush1.msra.mxu0 0.0
  %859 = vmatprep.subr.mxu0 0.0
  %860 = vmatpush1.msra.mxu0 0.0
  %861 = vmatprep.subr.mxu0 0.0
  %862 = vmatpush1.msra.mxu0 0.0
  %863 = vmatprep.subr.mxu0 0.0
  %864 = vmatpush1.msra.mxu0 0.0
  %865 = vmatprep.subr.mxu0 0.0
  %866 = vmatpush1.msra.mxu0 0.0
  %867 = vmatprep.subr.mxu0 0.0
  %868 = vmatpush1.msra.mxu0 0.0
  %869 = vmatprep.subr.mxu0 0.0
  %870 = vmatpush1.msra.mxu0 0.0
  %871 = vmatprep.subr.mxu0 0.0
  %872 = vmatpush1.msra.mxu0 0.0
  %873 = vmatprep.subr.mxu0 0.0
  %874 = vmatpush1.msra.mxu0 0.0
  %875 = vmatprep.subr.mxu0 0.0
  %876 = vmatpush1.msra.mxu0 %v173
  %877 = vmatprep.subr.mxu0 0.0
  %878 = vmatpush1.msra.mxu0 %v172
  %879 = vmatprep.subr.mxu0 0.0
  %880 = vmatpush1.msra.mxu0 %v171
  %881 = vmatprep.subr.mxu0 0.0
  %882 = vmatpush1.msra.mxu0 %v170
  %883 = vmatprep.subr.mxu0 0.0
  %884 = vmatpush2.msra.mxu0 0.0
  %885 = vmatprep.subr.mxu0 0.0
  %886 = vmatpush2.msra.mxu0 0.0
  %887 = vmatprep.subr.mxu0 0.0
  %888 = vmatpush2.msra.mxu0 0.0
  %889 = vmatprep.subr.mxu0 0.0
  %890 = vmatpush2.msra.mxu0 0.0
  %891 = vmatprep.subr.mxu0 0.0
  %892 = vmatpush2.msra.mxu0 0.0
  %893 = vmatprep.subr.mxu0 0.0
  %894 = vmatpush2.msra.mxu0 0.0
  %895 = vmatprep.subr.mxu0 0.0
  %896 = vmatpush2.msra.mxu0 0.0
  %897 = vmatprep.subr.mxu0 0.0
  %898 = vmatpush2.msra.mxu0 0.0
  %899 = vmatprep.subr.mxu0 0.0
  %900 = vmatpush2.msra.mxu0 0.0
  %901 = vmatprep.subr.mxu0 0.0
  %902 = vmatpush2.msra.mxu0 0.0
  %903 = vmatprep.subr.mxu0 0.0
  %904 = vmatpush2.msra.mxu0 0.0
  %905 = vmatprep.subr.mxu0 0.0
  %906 = vmatpush2.msra.mxu0 0.0
  %907 = vmatprep.subr.mxu0 0.0
  %908 = vmatpush2.msra.mxu0 0.0
  %909 = vmatprep.subr.mxu0 0.0
  %910 = vmatpush2.msra.mxu0 0.0
  %911 = vmatprep.subr.mxu0 0.0
  %912 = vmatpush2.msra.mxu0 0.0
  %913 = vmatprep.subr.mxu0 0.0
  %914 = vmatpush2.msra.mxu0 0.0
  %915 = vmatprep.mubr.f32.mxu0 0.0
  %916 = vmatmul.mubr.f32.gmra.mxu0 %v849
  %v917 = vpop.f32.mrf.mxu0
  %v918 = vadd.f32 0.0, %v917
  %v919 = vpop.f32.mrf.mxu0
  %920 = vdwg.mxu0
  %v921 = vadd.f32 %v167, %v918
  %v922 = vtanh.pop %v921
  %v923 = vxor.u32 %v921, 2147483648
  %v924 = vmul.f32 %v923, 1.442695
  %v925 = vpow.pop %v924
  %v926 = vadd.f32 %v925, 1.0
  %v927 = vrcp.pop %v926
  %v928 = vmul.f32 1.0, %v927
  %930 = vrot.lane.b32.xlu0 %v928, 96
  %v931 = vpop.permute.xlu0 %930
  %v933 = vmul.f32 %v922, %v931
  %934 = vrot.lane.b32.xlu0 %v928, 64
  %v935 = vpop.permute.xlu0 %934
  %v937 = vmul.f32 %v842, %v935
  %v938 = vadd.f32 %v933, %v937
  %v939 = vtanh.pop %v938
  %940 = vrot.lane.b32.xlu0 %v928, 32
  %v941 = vpop.permute.xlu0 %940
  %v943 = vmul.f32 %v939, %v941
  %v944 = vld [vmem:[%s4] sm:$0xff]
  %v945 = vld [vmem:[%s4 + $0x8] sm:$0xff]
  %v946 = vld [vmem:[%s4 + $0x10] sm:$0xff]
  %v947 = vld [vmem:[%s4 + $0x18] sm:$0xff]
  %v948 = vld [vmem:[%s5] sm:$0x1]
  %v950 = vlaneseq
  %v951 = vshrl.u32 %v950, 7
  %v952 = vsub.s32 0, %v951
  %v953 = vrot.slane %v948, %v952
  %v956 = vsel %vm174, %v943, 0
  %958 = vmatprep.subr.mxu0 0.0
  %959 = vmatpush1.msra.mxu0 0.0
  %960 = vmatprep.subr.mxu0 0.0
  %961 = vmatpush1.msra.mxu0 0.0
  %962 = vmatprep.subr.mxu0 0.0
  %963 = vmatpush1.msra.mxu0 0.0
  %964 = vmatprep.subr.mxu0 0.0
  %965 = vmatpush1.msra.mxu0 0.0
  %966 = vmatprep.subr.mxu0 0.0
  %967 = vmatpush1.msra.mxu0 0.0
  %968 = vmatprep.subr.mxu0 0.0
  %969 = vmatpush1.msra.mxu0 0.0
  %970 = vmatprep.subr.mxu0 0.0
  %971 = vmatpush1.msra.mxu0 0.0
  %972 = vmatprep.subr.mxu0 0.0
  %973 = vmatpush1.msra.mxu0 0.0
  %974 = vmatprep.subr.mxu0 0.0
  %975 = vmatpush1.msra.mxu0 0.0
  %976 = vmatprep.subr.mxu0 0.0
  %977 = vmatpush1.msra.mxu0 0.0
  %978 = vmatprep.subr.mxu0 0.0
  %979 = vmatpush1.msra.mxu0 0.0
  %980 = vmatprep.subr.mxu0 0.0
  %981 = vmatpush1.msra.mxu0 0.0
  %982 = vmatprep.subr.mxu0 0.0
  %983 = vmatpush1.msra.mxu0 %v947
  %984 = vmatprep.subr.mxu0 0.0
  %985 = vmatpush1.msra.mxu0 %v946
  %986 = vmatprep.subr.mxu0 0.0
  %987 = vmatpush1.msra.mxu0 %v945
  %988 = vmatprep.subr.mxu0 0.0
  %989 = vmatpush1.msra.mxu0 %v944
  %990 = vmatprep.subr.mxu0 0.0
  %991 = vmatpush2.msra.mxu0 0.0
  %992 = vmatprep.subr.mxu0 0.0
  %993 = vmatpush2.msra.mxu0 0.0
  %994 = vmatprep.subr.mxu0 0.0
  %995 = vmatpush2.msra.mxu0 0.0
  %996 = vmatprep.subr.mxu0 0.0
  %997 = vmatpush2.msra.mxu0 0.0
  %998 = vmatprep.subr.mxu0 0.0
  %999 = vmatpush2.msra.mxu0 0.0
  %1000 = vmatprep.subr.mxu0 0.0
  %1001 = vmatpush2.msra.mxu0 0.0
  %1002 = vmatprep.subr.mxu0 0.0
  %1003 = vmatpush2.msra.mxu0 0.0
  %1004 = vmatprep.subr.mxu0 0.0
  %1005 = vmatpush2.msra.mxu0 0.0
  %1006 = vmatprep.subr.mxu0 0.0
  %1007 = vmatpush2.msra.mxu0 0.0
  %1008 = vmatprep.subr.mxu0 0.0
  %1009 = vmatpush2.msra.mxu0 0.0
  %1010 = vmatprep.subr.mxu0 0.0
  %1011 = vmatpush2.msra.mxu0 0.0
  %1012 = vmatprep.subr.mxu0 0.0
  %1013 = vmatpush2.msra.mxu0 0.0
  %1014 = vmatprep.subr.mxu0 0.0
  %1015 = vmatpush2.msra.mxu0 0.0
  %1016 = vmatprep.subr.mxu0 0.0
  %1017 = vmatpush2.msra.mxu0 0.0
  %1018 = vmatprep.subr.mxu0 0.0
  %1019 = vmatpush2.msra.mxu0 0.0
  %1020 = vmatprep.subr.mxu0 0.0
  %1021 = vmatpush2.msra.mxu0 0.0
  %1022 = vmatprep.mubr.f32.mxu0 0.0
  %1023 = vmatmul.mubr.f32.gmra.mxu0 %v956
  %v1024 = vpop.f32.mrf.mxu0
  %v1025 = vadd.f32 %v953, %v1024
  %v1026 = vpop.f32.mrf.mxu0
  %1027 = vdwg.mxu0
  %1028 = vmax.xlane.f32.xlu0 %v1025
  %v1029 = vpop.xlane.xlu0 %1028
  %v1030 = vsub.f32 %v1025, %v1029
  %v1031 = vmul.f32 %v1030, 1.442695
  %v1032 = vpow.pop %v1031
  %1033 = vadd.xlane.f32.xlu0 %v1032
  %v1034 = vpop.xlane.xlu0 %1033
  %v1035 = vlog2.pop %v1034
  %v1036 = vmul.f32 %v1035, 0.6931472
  %v1037 = vadd.f32 %v1036, %v1029
  %v1038 = vsub.f32 %v1025, %v1037
  %1039 = vst [vmem:[%s6] sm:$0xff] %v1038
  // Predicated region
  $region26: #{lstm_forward.1} parent=0 // pred_check
    _
  $region27: #{lstm_forward.1} parent=0 // pred_check_branch
    %1041 = sbr.rel (0) target = $region29
  $region28: #{lstm_forward.1} parent=0 // pred_region
    _
  $region29: #{lstm_forward.1} parent=0 // pred_fallthru
    _
  // Predicated region
  $region30: #{lstm_forward.1} parent=0 // pred_check
    _
  $region31: #{lstm_forward.1} parent=0 // pred_check_branch
    %1043 = sbr.rel (0) target = $region33
  $region32: #{lstm_forward.1} parent=0 // pred_region
    _
  $region33: #{lstm_forward.1} parent=0 // pred_fallthru
    _

</llo_original>
